<compile_context>
chip_gen: v7x
topology: tpu7x:2x2x1
jax: 0.10.0
libtpu: 0.0.40
codegen_flags: <defaults>
</compile_context>

<pallas_src>
import jax
import jax.numpy as jnp
from jax.experimental import pallas as pl
from jax.experimental.pallas import tpu as pltpu

LANE = 128
# Max rows per block for f32: 4096 * 128 * 4 B = 2 MiB per block.
# 2 arrays (in + out) x 2 pipeline buffers x 2 MiB = 8 MiB VMEM footprint,
# which fits v5e's 16 MiB default scoped VMEM and leaves headroom on v6e/v7x.
MAX_BLOCK_ROWS = 4096


def _make_fq_kernel(num_levels: int):
    levels_m1 = float(num_levels - 1)

    def fq_kernel(scalars_ref, x_ref, o_ref):
        # scalars_ref: SMEM (3,) = [a, b, c] with
        #   a = (num_levels - 1) / (uF - lF)
        #   b = -lF * a
        #   c = output_scale / (num_levels - 1)
        a = scalars_ref[0]
        b = scalars_ref[1]
        c = scalars_ref[2]
        t = jnp.clip(x_ref[...] * a + b, 0.0, levels_m1)
        o_ref[...] = (jnp.round(t) * c).astype(o_ref.dtype)

    return fq_kernel


def feature_quantizer_forward(feature, lF, uF, output_scale, *, num_levels):
    """Pallas implementation of FeatureQuantizer.forward (init==0 path).

    feature: float array, any shape (e.g. NCHW).
    lF, uF, output_scale: python floats / 0-d arrays (the nn.Parameters).
    num_levels: static int (module hyperparameter).
    """
    orig_shape = feature.shape
    dtype = feature.dtype
    n = feature.size

    # Rows-per-sublane packing for sub-32-bit dtypes (bf16 packs 2, int8/fp8
    # pack 4); the row tile must stay a multiple of the packed sublane tile.
    itemsize = jnp.dtype(dtype).itemsize
    sublane = {4: 8, 2: 16, 1: 32}.get(itemsize, 8)

    flat = feature.reshape(-1)
    lane_pad = (-n) % LANE
    if lane_pad:
        # Only pad when strictly necessary (rare for NCHW conv maps where
        # C*H*W is usually already a multiple of 128). Ragged rows vs the
        # block are handled by Pallas OOB read-pad / masked writes.
        flat = jnp.pad(flat, (0, lane_pad))
    rows = flat.shape[0] // LANE
    x2d = flat.reshape(rows, LANE)

    # Largest block that divides the packed sublane tile, capped for VMEM.
    block_rows = min(MAX_BLOCK_ROWS, ((rows + sublane - 1) // sublane) * sublane)
    grid = (pl.cdiv(rows, block_rows),)

    # Fold the affine math into scalars (computed once on host/XLA side).
    # Note: uF == lF gives inf/nan exactly as the PyTorch module would.
    levels_m1 = jnp.float32(num_levels - 1)
    a = levels_m1 / (jnp.float32(uF) - jnp.float32(lF))
    b = -jnp.float32(lF) * a
    c = jnp.float32(output_scale) / levels_m1
    scalars = jnp.stack([a, b, c]).astype(jnp.float32)

    out = pl.pallas_call(
        _make_fq_kernel(num_levels),
        out_shape=jax.ShapeDtypeStruct((rows, LANE), dtype),
        grid=grid,
        in_specs=[
            pl.BlockSpec(memory_space=pltpu.SMEM),
            pl.BlockSpec((block_rows, LANE), lambda i: (i, 0)),
        ],
        out_specs=pl.BlockSpec((block_rows, LANE), lambda i: (i, 0)),
        compiler_params=pltpu.CompilerParams(
            dimension_semantics=("parallel",),
        ),
        cost_estimate=pl.CostEstimate(
            flops=4 * rows * LANE,
            transcendentals=0,
            bytes_accessed=2 * rows * LANE * itemsize,
        ),
    )(scalars, x2d)

    out_flat = out.reshape(-1)
    if lane_pad:
        out_flat = out_flat[:n]
    return out_flat.reshape(orig_shape)


def feature_quantizer_ref(feature, lF, uF, output_scale, *, num_levels):
    f = (feature - lF) / (uF - lF)
    f = jnp.clip(f, 0.0, 1.0)
    q = jnp.round(f * (num_levels - 1)) / (num_levels - 1)
    return q * output_scale


if __name__ == "__main__":
    # Deterministic parameter init, matching FeatureQuantizer.__init__:
    #   uF = 1.0, lF = 0.0, output_scale = 1.0
    # (bkwd_scaling_factorF / scaling_factor only affect the backward pass;
    #  EWGS and STE discretizers have identical forwards.)
    num_levels = 4          # e.g. 2-bit feature quantization
    scaling_factor = 1e-3   # unused in forward
    uF = 1.0
    lF = 0.0
    output_scale = 1.0

    key = jax.random.PRNGKey(0)
    # NCHW feature map, small shape consistent with a CIFAR conv feature.
    x = jax.random.normal(key, (2, 4, 16, 16), dtype=jnp.float32)

    out = feature_quantizer_forward(
        x, lF, uF, output_scale, num_levels=num_levels
    )
    out = jax.block_until_ready(out)

    ref = feature_quantizer_ref(
        x, lF, uF, output_scale, num_levels=num_levels
    )
    assert out.shape == x.shape and out.dtype == x.dtype
    # Folded-affine constants can differ from the reference by ~1 ulp of the
    # quantized value (reciprocal vs divide); loosen tolerance accordingly.
    assert jnp.allclose(out, ref, atol=1e-5), "mismatch vs reference"

    print("KERNEL_OK")
</pallas_src>

<mosaic_0001>
module attributes {stable_mosaic.version = 11 : i64} {
  func.func @fq_kernel(%arg0: i32, %arg1: memref<3xf32, #tpu.memory_space<smem>>, %arg2: memref<16x128xf32, #tpu.memory_space<vmem>>, %arg3: memref<16x128xf32, #tpu.memory_space<vmem>>) attributes {dimension_semantics = [#tpu.dimension_semantics<parallel>], iteration_bounds = array<i64: 1>, scalar_prefetch = 0 : i64, scratch_operands = 0 : i64, tpu.core_type = #tpu.core_type<tc>, window_params = [{transform_indices = @transform_0, window_bounds = array<i64: 3>}, {transform_indices = @transform_1, window_bounds = array<i64: 16, 128>}, {transform_indices = @transform_2, window_bounds = array<i64: 16, 128>}]} {
    %c0 = arith.constant 0 : index
    %0 = memref.load %arg1[%c0] : memref<3xf32, #tpu.memory_space<smem>>
    %c1 = arith.constant 1 : index
    %1 = memref.load %arg1[%c1] : memref<3xf32, #tpu.memory_space<smem>>
    %c2 = arith.constant 2 : index
    %2 = memref.load %arg1[%c2] : memref<3xf32, #tpu.memory_space<smem>>
    %c0_0 = arith.constant 0 : index
    %c0_1 = arith.constant 0 : index
    %3 = vector.load %arg2[%c0_0, %c0_1] : memref<16x128xf32, #tpu.memory_space<vmem>>, vector<16x128xf32>
    %4 = vector.broadcast %0 : f32 to vector<16x128xf32>
    %5 = arith.mulf %3, %4 : vector<16x128xf32>
    %6 = vector.broadcast %1 : f32 to vector<16x128xf32>
    %7 = arith.addf %5, %6 : vector<16x128xf32>
    %cst = arith.constant 0.000000e+00 : f32
    %cst_2 = arith.constant 3.000000e+00 : f32
    %8 = vector.broadcast %cst : f32 to vector<16x128xf32>
    %9 = arith.maximumf %8, %7 : vector<16x128xf32>
    %10 = vector.broadcast %cst_2 : f32 to vector<16x128xf32>
    %11 = arith.minimumf %10, %9 : vector<16x128xf32>
    %12 = math.roundeven %11 : vector<16x128xf32>
    %13 = vector.broadcast %2 : f32 to vector<16x128xf32>
    %14 = arith.mulf %12, %13 : vector<16x128xf32>
    %c0_3 = arith.constant 0 : index
    %c0_4 = arith.constant 0 : index
    %15 = vector.load %arg3[%c0_3, %c0_4] : memref<16x128xf32, #tpu.memory_space<vmem>>, vector<16x128xf32>
    tpu.vector_store %arg3[%c0_3, %c0_4], %14 {strides = array<i32>} : memref<16x128xf32, #tpu.memory_space<vmem>>, vector<16x128xf32>,
    return
  }
  func.func @transform_0(%arg0: i32) -> i32 {
    %c0_i32 = arith.constant 0 : i32
    %c0_i32_0 = arith.constant 0 : i32
    return %c0_i32 : i32
  }
  func.func @transform_1(%arg0: i32) -> (i32, i32) {
    %c0_i32 = arith.constant 0 : i32
    %c0_i32_0 = arith.constant 0 : i32
    return %arg0, %c0_i32 : i32, i32
  }
  func.func @transform_2(%arg0: i32) -> (i32, i32) {
    %c0_i32 = arith.constant 0 : i32
    %c0_i32_0 = arith.constant 0 : i32
    return %arg0, %c0_i32 : i32, i32
  }
}

</mosaic_0001>

<llo_original>
// kernel: tpu_custom_call.1
$region0: #{tpu_custom_call.1}
  #allocation0 [shape = 'u32[]', space=smem, size = 0x4, offset = 0x4, fixed_abs, tag = 'smem constant byte address 0x4 - core index']
  #allocation1 [shape = 'u32[144,128]{1,0:T(1,128)}', space=vmem, size = 0x12000, scoped, tag = 'internal scratch']
  %s0 = inlined_call_operand.hbm [shape: f32[3], index: 0, kind: input, shape index: {}]
  %s1 = inlined_call_operand.hbm [shape: f32[16,128], index: 1, kind: input, shape index: {}]
  %s2 = inlined_call_operand.hbm [shape: f32[16,128], index: 2, kind: output, shape index: {}]
  %s3 = sld [smem:[#allocation0]]
  $region26: #{tpu_custom_call.1} parent=0
    _
  %s5 = ssub.s32 1, %s3
  %s6 = scalar_select 0, %s5, %s3
  $region1: #{tpu_custom_call.1} parent=0
    #allocation2 [shape = 'u8[512]{0}', space=smem, size = 0x200, scoped, tag = 'input window, operand 0, single buffered']
    #allocation3 [shape = 's32[1]{0}', space=sflag, size = 0x4, scoped, tag = 'scoped memory for tpu_custom_call.1']
    #allocation4 [shape = 's32[1]{0}', space=sflag, size = 0x4, scoped, tag = 'scoped memory for tpu_custom_call.1']
    #allocation5 [shape = 's32[1]{0}', space=sflag, size = 0x4, scoped, tag = 'scoped memory for tpu_custom_call.1']
    #allocation6 [shape = 'u8[8192]{0}', space=vmem, size = 0x2000, scoped, tag = 'input window, operand 1, single buffered']
    #allocation7 [shape = 'u8[8192]{0}', space=vmem, size = 0x2000, scoped, tag = 'output window, operand 0, single buffered']
    %7 = vsyncpa [#allocation5], 0
    %8 = vsyncpa [#allocation3], 0
    %9 = vsyncpa [#allocation4], 0
    // Predicated region
    $region2: #{tpu_custom_call.1} parent=1 // pred_check
      _
    $region3: #{tpu_custom_call.1} parent=1 // pred_check_branch
      %11 = sbr.rel (0) target = $region5
    $region4: #{tpu_custom_call.1} parent=1 // pred_region
      %s13 = ssub.s32 16, 16
      %14 = vsyncadd [#allocation5], %s13
      %17 = dma.hbm_to_smem %s0, 16, [#allocation2], [#allocation5]
    $region5: #{tpu_custom_call.1} parent=1 // pred_fallthru
      _
    // Predicated region
    $region6: #{tpu_custom_call.1} parent=1 // pred_check
      _
    $region7: #{tpu_custom_call.1} parent=1 // pred_check_branch
      %19 = sbr.rel (0) target = $region9
    $region8: #{tpu_custom_call.1} parent=1 // pred_region
      %s21 = ssub.s32 256, 256
      %22 = vsyncadd [#allocation3], %s21
      %s23 = sshll.u32 [#allocation6], 4
      %s24 = int_to_ptr.vmem [resolvable:$true] %s23
      %29 = dma.hbm_to_vmem [thread:$0]  %s1, 256, %s24, [#allocation3], 128, 128, 8
    $region9: #{tpu_custom_call.1} parent=1 // pred_fallthru
      _
    // Predicated region
    $region10: #{tpu_custom_call.1} parent=1 // pred_check
      _
    $region11: #{tpu_custom_call.1} parent=1 // pred_check_branch
      %31 = sbr.rel (0) target = $region13
    $region12: #{tpu_custom_call.1} parent=1 // pred_region
      %32 = dma.done [#allocation5], 16
    $region13: #{tpu_custom_call.1} parent=1 // pred_fallthru
      _
    // Predicated region
    $region14: #{tpu_custom_call.1} parent=1 // pred_check
      _
    $region15: #{tpu_custom_call.1} parent=1 // pred_check_branch
      %34 = sbr.rel (0) target = $region17
    $region16: #{tpu_custom_call.1} parent=1 // pred_region
      %35 = dma.done [#allocation3], 256
    $region17: #{tpu_custom_call.1} parent=1 // pred_fallthru
      _
    %36 = sfence
    %s37 = sld [smem:[#allocation2]]
    %s38 = sld [smem:[#allocation2 + $0x1]]
    %s39 = sld [smem:[#allocation2 + $0x2]]
    %v40 = vld [vmem:[#allocation6] sm:$0xff]
    %v41 = vld [vmem:[#allocation6 + $0x8] sm:$0xff]
    %v42 = vstv %s37
    %v43 = vmul.f32 %v40, %v42
    %v44 = vmul.f32 %v41, %v42
    %v45 = vstv %s38
    %v46 = vadd.f32 %v43, %v45
    %v47 = vadd.f32 %v44, %v45
    %v48 = vmax.f32 %v46, 0.0
    %v49 = vmax.f32 %v47, 0.0
    %v50 = vmin.f32 %v48, 3.0
    %v51 = vmin.f32 %v49, 3.0
    %v52 = vround.ne.pseudo %v50
    %v53 = vround.ne.pseudo %v51
    %v54 = vstv %s39
    %v55 = vmul.f32 %v52, %v54
    %v56 = vmul.f32 %v53, %v54
    %57 = vst [vmem:[#allocation7] sm:$0xff] %v55
    %58 = vst [vmem:[#allocation7 + $0x8] sm:$0xff] %v56
    // Predicated region
    $region18: #{tpu_custom_call.1} parent=1 // pred_check
      _
    $region19: #{tpu_custom_call.1} parent=1 // pred_check_branch
      %60 = sbr.rel (0) target = $region21
    $region20: #{tpu_custom_call.1} parent=1 // pred_region
      %s62 = ssub.s32 256, 256
      %63 = vsyncadd [#allocation4], %s62
      %s64 = sshll.u32 [#allocation7], 4
      %s65 = int_to_ptr.vmem [resolvable:$true] %s64
      %70 = dma.vmem_to_hbm [thread:$0]  %s65, 256, %s2, [#allocation4], 128, 128, 8
    $region21: #{tpu_custom_call.1} parent=1 // pred_fallthru
      _
    // Predicated region
    $region22: #{tpu_custom_call.1} parent=1 // pred_check
      _
    $region23: #{tpu_custom_call.1} parent=1 // pred_check_branch
      %72 = sbr.rel (0) target = $region25
    $region24: #{tpu_custom_call.1} parent=1 // pred_region
      %73 = dma.done [#allocation4], 256
    $region25: #{tpu_custom_call.1} parent=1 // pred_fallthru
      _
    %74 = vsyncpa [#allocation3], 1
    %75 = vsyncpa [#allocation4], 1
    %76 = vsyncpa [#allocation5], 1

</llo_original>
